<compile_context>
chip_gen: v5e
topology: v5e:2x2
jax: 0.10.0
libtpu: 0.0.40
codegen_flags: <defaults>
</compile_context>

<pallas_src>
import functools
import math

import jax
import jax.numpy as jnp
from jax import lax
from jax.experimental import pallas as pl
from jax.experimental.pallas import tpu as pltpu


# --------------------------------------------------------------------------- #
# Helpers
# --------------------------------------------------------------------------- #
def _pick_tile(s, target):
    """Largest divisor of s that is <= target, preferring multiples of 16 (bf16 tiles)."""
    if s <= target:
        return s
    for align in (16, 8):
        t = (min(target, s) // align) * align
        while t >= align:
            if s % t == 0:
                return t
            t -= align
    return s


def _vmem_limit_bytes():
    """Generation-aware scoped-VMEM limit (leave headroom for compiler scratch)."""
    try:
        info = pltpu.get_tpu_info()
        cap = None
        for name in ("vmem_capacity_bytes", "vmem_bytes", "vmem_size_bytes"):
            cap = getattr(info, name, None)
            if cap:
                break
        if cap:
            return int(max(min(cap - 16 * 1024 * 1024, 100 * 1024 * 1024),
                           32 * 1024 * 1024))
    except Exception:
        pass
    return 48 * 1024 * 1024   # safe default: fits inside v7x's 64 MiB physical VMEM


# --------------------------------------------------------------------------- #
# Kernel A: tiled GroupNorm statistics -> per-channel scale / shift (per batch).
# grid = (B, nS); sequence axis is the (arbitrary) reduction axis.
# --------------------------------------------------------------------------- #
def _groupnorm_stats_kernel(gmat_ref, gmatT_ref, gamma_ref, beta_ref, x_ref,
                            scale_ref, shift_ref, sum_sc, sq_sc, *, eps, inv_n):
    si = pl.program_id(1)
    ns = pl.num_programs(1)

    @pl.when(si == 0)
    def _init():
        sum_sc[...] = jnp.zeros_like(sum_sc)
        sq_sc[...] = jnp.zeros_like(sq_sc)

    x = x_ref[0]                                                   # (ts, C) f32
    sum_sc[...] += jnp.sum(x, axis=0, keepdims=True)               # (1, C)
    sq_sc[...] += jnp.sum(x * x, axis=0, keepdims=True)            # (1, C)

    @pl.when(si == ns - 1)
    def _finalize():
        # Group reductions via the channel->group membership matrix (f32).
        mean_g = jnp.dot(sum_sc[...], gmat_ref[...],
                         preferred_element_type=jnp.float32) * inv_n          # (1, G)
        e2_g = jnp.dot(sq_sc[...], gmat_ref[...],
                       preferred_element_type=jnp.float32) * inv_n            # (1, G)
        var_g = jnp.maximum(e2_g - mean_g * mean_g, 0.0)
        inv_g = lax.rsqrt(var_g + eps)
        mean_c = jnp.dot(mean_g, gmatT_ref[...], preferred_element_type=jnp.float32)
        inv_c = jnp.dot(inv_g, gmatT_ref[...], preferred_element_type=jnp.float32)
        scale = inv_c * gamma_ref[...]             # xn = x*scale + shift
        shift = beta_ref[...] - mean_c * scale
        scale_ref[0] = scale
        shift_ref[0] = shift


# --------------------------------------------------------------------------- #
# Kernel B: GroupNorm affine fold + qkv 1x1 conv -> bf16 Q, K, V in HBM.
# grid = (B, nP); both axes independent ("parallel").
# --------------------------------------------------------------------------- #
def _qkv_proj_kernel(scale_ref, shift_ref, wq_ref, wk_ref, wv_ref, x_ref,
                     q_ref, k_ref, v_ref):
    xn = (x_ref[0] * scale_ref[0] + shift_ref[0]).astype(jnp.bfloat16)   # (tp, C)
    q_ref[0] = jnp.dot(xn, wq_ref[...],
                       preferred_element_type=jnp.float32).astype(jnp.bfloat16)
    k_ref[0] = jnp.dot(xn, wk_ref[...],
                       preferred_element_type=jnp.float32).astype(jnp.bfloat16)
    v_ref[0] = jnp.dot(xn, wv_ref[...],
                       preferred_element_type=jnp.float32).astype(jnp.bfloat16)


# --------------------------------------------------------------------------- #
# Kernel C: flash attention + output 1x1 conv + bias + residual.
# grid = (B, n_q_tiles, n_kv_tiles); kv is the innermost (reduction) axis.
# --------------------------------------------------------------------------- #
def _attention_kernel(q_ref, k_ref, v_ref, x_ref, wo_ref, bout_ref, o_ref,
                      m_sc, l_sc, acc_sc, *, n_head):
    ki = pl.program_id(2)
    nk = pl.num_programs(2)
    hd = acc_sc.shape[-1]

    @pl.when(ki == 0)
    def _init():
        m_sc[...] = jnp.full(m_sc.shape, -jnp.inf, dtype=jnp.float32)
        l_sc[...] = jnp.zeros(l_sc.shape, dtype=jnp.float32)
        acc_sc[...] = jnp.zeros(acc_sc.shape, dtype=jnp.float32)

    q = q_ref[0]                                                   # (tq, C) bf16
    k = k_ref[0]                                                   # (tk, C) bf16
    v = v_ref[0]                                                   # (tk, C) bf16

    for h in range(n_head):                                        # small, unrolled
        sl = slice(h * hd, (h + 1) * hd)
        # QK^T contracting the last dims -> no explicit bf16 transpose materialized.
        s = lax.dot_general(q[:, sl], k[:, sl],
                            dimension_numbers=(((1,), (1,)), ((), ())),
                            preferred_element_type=jnp.float32)    # (tq, tk) f32
        m_prev = m_sc[h]                                           # (tq, 1)
        m_new = jnp.maximum(m_prev, jnp.max(s, axis=-1, keepdims=True))
        alpha = jnp.exp(m_prev - m_new)
        p = jnp.exp(s - m_new)                                     # f32
        l_sc[h] = alpha * l_sc[h] + jnp.sum(p, axis=-1, keepdims=True)
        # Full-block per-head accumulator write (no masked partial-lane RMW).
        acc_sc[h] = alpha * acc_sc[h] + jnp.dot(
            p.astype(jnp.bfloat16), v[:, sl], preferred_element_type=jnp.float32)
        m_sc[h] = m_new

    @pl.when(ki == nk - 1)
    def _finalize():
        C = o_ref.shape[-1]
        tq = o_ref.shape[-2]
        out = jnp.zeros((tq, C), jnp.float32)
        for h in range(n_head):
            inv_l = pl.reciprocal(l_sc[h], approx=False)           # once per q-tile
            attn_h = (acc_sc[h] * inv_l).astype(jnp.bfloat16)      # (tq, hd)
            out = out + jnp.dot(attn_h, wo_ref[h * hd:(h + 1) * hd, :],
                                preferred_element_type=jnp.float32)
        o_ref[0] = out + bout_ref[...] + x_ref[0]                  # +bias +residual


# --------------------------------------------------------------------------- #
# Wrapper
# --------------------------------------------------------------------------- #
def self_attention_pallas(x_nchw, gamma, beta, wqkv, wout, bout, *,
                          n_head, norm_groups, eps=1e-5,
                          q_tile=None, kv_tile=None, stat_tile=None, proj_tile=None):
    B, C, H, W = x_nchw.shape
    S = H * W
    G = norm_groups
    assert C % G == 0 and C % n_head == 0
    cg = C // G
    hd = C // n_head

    tq = q_tile or _pick_tile(S, 256)
    tk = kv_tile or _pick_tile(S, 256)
    ts = stat_tile or _pick_tile(S, 512)
    tp = proj_tile or _pick_tile(S, 256)
    for t in (tq, tk, ts, tp):
        assert S % t == 0 and (t == S or t % 8 == 0)

    vmem_limit = _vmem_limit_bytes()

    # TODO(synk): in a full model keep activations NHWC end-to-end so these two
    # wrapper-side layout round trips disappear (flagged by the perf review).
    x_tok = jnp.transpose(x_nchw, (0, 2, 3, 1)).reshape(B, S, C).astype(jnp.float32)

    # Channel -> group membership matrices for GroupNorm group reductions.
    gmat = (jnp.arange(C)[:, None] // cg == jnp.arange(G)[None, :]).astype(jnp.float32)
    gmatT = gmat.T
    gamma2 = gamma.reshape(1, C).astype(jnp.float32)
    beta2 = beta.reshape(1, C).astype(jnp.float32)

    # ---- pass A: tiled GroupNorm statistics -> per-(batch, channel) scale / shift ----
    nS = S // ts
    stats_kernel = functools.partial(_groupnorm_stats_kernel, eps=eps,
                                     inv_n=1.0 / float(S * cg))
    scale_c, shift_c = pl.pallas_call(
        stats_kernel,
        out_shape=(jax.ShapeDtypeStruct((B, 1, C), jnp.float32),
                   jax.ShapeDtypeStruct((B, 1, C), jnp.float32)),
        grid_spec=pltpu.PrefetchScalarGridSpec(
            num_scalar_prefetch=0,
            grid=(B, nS),
            in_specs=[
                pl.BlockSpec((C, G), lambda b, s: (0, 0)),
                pl.BlockSpec((G, C), lambda b, s: (0, 0)),
                pl.BlockSpec((1, C), lambda b, s: (0, 0)),
                pl.BlockSpec((1, C), lambda b, s: (0, 0)),
                pl.BlockSpec((1, ts, C), lambda b, s: (b, s, 0)),
            ],
            out_specs=[pl.BlockSpec((1, 1, C), lambda b, s: (b, 0, 0)),
                       pl.BlockSpec((1, 1, C), lambda b, s: (b, 0, 0))],
            scratch_shapes=[pltpu.VMEM((1, C), jnp.float32),
                            pltpu.VMEM((1, C), jnp.float32)],
        ),
        compiler_params=pltpu.CompilerParams(
            dimension_semantics=("parallel", "arbitrary"),
            vmem_limit_bytes=vmem_limit),
    )(gmat, gmatT, gamma2, beta2, x_tok)

    # ---- weight prep: PyTorch chunk order is head-major interleaved [q|k|v] per head ----
    # qkv.view(B, n_head, 3*hd, H, W).chunk(3, dim=2)  =>  wqkv.reshape(n_head, 3, hd, C)
    w = wqkv.reshape(n_head, 3, hd, C).astype(jnp.float32)
    wqT = (w[:, 0].reshape(C, C).T / math.sqrt(C)).astype(jnp.bfloat16)   # 1/sqrt(C) folded
    wkT = w[:, 1].reshape(C, C).T.astype(jnp.bfloat16)
    wvT = w[:, 2].reshape(C, C).T.astype(jnp.bfloat16)
    woT = wout.reshape(C, C).astype(jnp.float32).T.astype(jnp.bfloat16)
    bout2 = bout.reshape(1, C).astype(jnp.float32)

    # ---- pass B: GroupNorm affine + qkv projection -> bf16 Q, K, V in HBM ----
    nP = S // tp
    q_hbm, k_hbm, v_hbm = pl.pallas_call(
        _qkv_proj_kernel,
        out_shape=(jax.ShapeDtypeStruct((B, S, C), jnp.bfloat16),
                   jax.ShapeDtypeStruct((B, S, C), jnp.bfloat16),
                   jax.ShapeDtypeStruct((B, S, C), jnp.bfloat16)),
        grid_spec=pltpu.PrefetchScalarGridSpec(
            num_scalar_prefetch=0,
            grid=(B, nP),
            in_specs=[
                pl.BlockSpec((1, 1, C), lambda b, s: (b, 0, 0)),   # scale
                pl.BlockSpec((1, 1, C), lambda b, s: (b, 0, 0)),   # shift
                pl.BlockSpec((C, C), lambda b, s: (0, 0)),         # wq^T (pre-scaled)
                pl.BlockSpec((C, C), lambda b, s: (0, 0)),         # wk^T
                pl.BlockSpec((C, C), lambda b, s: (0, 0)),         # wv^T
                pl.BlockSpec((1, tp, C), lambda b, s: (b, s, 0)),  # x tile
            ],
            out_specs=[pl.BlockSpec((1, tp, C), lambda b, s: (b, s, 0)),
                       pl.BlockSpec((1, tp, C), lambda b, s: (b, s, 0)),
                       pl.BlockSpec((1, tp, C), lambda b, s: (b, s, 0))],
        ),
        compiler_params=pltpu.CompilerParams(
            dimension_semantics=("parallel", "parallel"),
            vmem_limit_bytes=vmem_limit),
    )(scale_c, shift_c, wqT, wkT, wvT, x_tok)

    # ---- pass C: flash attention + output projection + bias + residual ----
    nq, nk = S // tq, S // tk
    attn_kernel = functools.partial(_attention_kernel, n_head=n_head)
    out_tok = pl.pallas_call(
        attn_kernel,
        out_shape=jax.ShapeDtypeStruct((B, S, C), jnp.float32),
        grid_spec=pltpu.PrefetchScalarGridSpec(
            num_scalar_prefetch=0,
            grid=(B, nq, nk),
            in_specs=[
                pl.BlockSpec((1, tq, C), lambda b, qi, ki: (b, qi, 0)),  # Q (bf16)
                pl.BlockSpec((1, tk, C), lambda b, qi, ki: (b, ki, 0)),  # K (bf16)
                pl.BlockSpec((1, tk, C), lambda b, qi, ki: (b, ki, 0)),  # V (bf16)
                pl.BlockSpec((1, tq, C), lambda b, qi, ki: (b, qi, 0)),  # x residual (f32)
                pl.BlockSpec((C, C), lambda b, qi, ki: (0, 0)),          # wout^T
                pl.BlockSpec((1, C), lambda b, qi, ki: (0, 0)),          # bout
            ],
            out_specs=pl.BlockSpec((1, tq, C), lambda b, qi, ki: (b, qi, 0)),
            scratch_shapes=[
                pltpu.VMEM((n_head, tq, 1), jnp.float32),    # running max
                pltpu.VMEM((n_head, tq, 1), jnp.float32),    # running denominator
                pltpu.VMEM((n_head, tq, hd), jnp.float32),   # per-head un-normalized out
            ],
        ),
        compiler_params=pltpu.CompilerParams(
            dimension_semantics=("parallel", "parallel", "arbitrary"),
            vmem_limit_bytes=vmem_limit),
    )(q_hbm, k_hbm, v_hbm, x_tok, woT, bout2)

    return out_tok.reshape(B, H, W, C).transpose((0, 3, 1, 2)).astype(x_nchw.dtype)


# --------------------------------------------------------------------------- #
# Pure-JAX reference (mirrors the PyTorch forward, NCHW)
# --------------------------------------------------------------------------- #
def self_attention_reference(x, gamma, beta, wqkv, wout, bout, *, n_head, norm_groups, eps=1e-5):
    B, C, H, W = x.shape
    G = norm_groups
    cg = C // G
    xg = x.reshape(B, G, cg, H, W)
    mean = xg.mean(axis=(2, 3, 4), keepdims=True)
    var = xg.var(axis=(2, 3, 4), keepdims=True)
    xn = ((xg - mean) / jnp.sqrt(var + eps)).reshape(B, C, H, W)
    xn = xn * gamma[None, :, None, None] + beta[None, :, None, None]
    qkv = jnp.einsum('oc,bchw->bohw', wqkv.reshape(3 * C, C), xn)
    hd = C // n_head
    qkv = qkv.reshape(B, n_head, 3 * hd, H, W)
    q, k, v = jnp.split(qkv, 3, axis=2)
    attn = jnp.einsum('bnchw,bncyx->bnhwyx', q, k) / math.sqrt(C)
    attn = attn.reshape(B, n_head, H, W, H * W)
    attn = jax.nn.softmax(attn, axis=-1)
    attn = attn.reshape(B, n_head, H, W, H, W)
    out = jnp.einsum('bnhwyx,bncyx->bnchw', attn, v).reshape(B, C, H, W)
    out = jnp.einsum('oc,bchw->bohw', wout.reshape(C, C), out) + bout[None, :, None, None]
    return out + x


if __name__ == "__main__":
    key = jax.random.PRNGKey(0)

    configs = [
        # (B, C, H, W, n_head, norm_groups, tile_overrides)
        (2, 32, 8, 8, 1, 32, {}),                                   # module defaults
        (1, 32, 16, 16, 2, 8, {}),                                  # multi-head, S=256
        (1, 32, 16, 16, 2, 8, dict(q_tile=64, kv_tile=64,           # forced multi-tile
                                   stat_tile=64, proj_tile=64)),    # flash / stats / proj
    ]
    for (B, C, H, W, n_head, norm_groups, tiles) in configs:
        key, k_x, k_g, k_b, k_qkv, k_o, k_ob = jax.random.split(key, 7)
        x = jax.random.normal(k_x, (B, C, H, W), dtype=jnp.float32)
        gamma = 1.0 + 0.1 * jax.random.normal(k_g, (C,), dtype=jnp.float32)       # GN weight
        beta = 0.1 * jax.random.normal(k_b, (C,), dtype=jnp.float32)              # GN bias
        wqkv = 0.1 * jax.random.normal(k_qkv, (3 * C, C, 1, 1), dtype=jnp.float32)  # bias=False
        wout = 0.1 * jax.random.normal(k_o, (C, C, 1, 1), dtype=jnp.float32)
        bout = 0.1 * jax.random.normal(k_ob, (C,), dtype=jnp.float32)

        y = self_attention_pallas(x, gamma, beta, wqkv, wout, bout,
                                  n_head=n_head, norm_groups=norm_groups, **tiles)
        y = jax.block_until_ready(y)

        y_ref = self_attention_reference(x, gamma, beta, wqkv, wout, bout,
                                         n_head=n_head, norm_groups=norm_groups)
        assert y.shape == (B, C, H, W)
        # bf16 MXU matmuls (f32 accumulation) -> modest tolerance vs. pure-f32 reference
        err = float(jnp.max(jnp.abs(y - y_ref)))
        assert jnp.allclose(y, y_ref, rtol=1e-2, atol=1e-2), err

    print("KERNEL_OK")
</pallas_src>

<mosaic_0001>
module attributes {stable_mosaic.version = 11 : i64} {
  func.func @_groupnorm_stats_kernel(%arg0: i32, %arg1: i32, %arg2: memref<32x32xf32, #tpu.memory_space<vmem>>, %arg3: memref<32x32xf32, #tpu.memory_space<vmem>>, %arg4: memref<1x32xf32, #tpu.memory_space<vmem>>, %arg5: memref<1x32xf32, #tpu.memory_space<vmem>>, %arg6: memref<1x64x32xf32, #tpu.memory_space<vmem>>, %arg7: memref<1x1x32xf32, #tpu.memory_space<vmem>>, %arg8: memref<1x1x32xf32, #tpu.memory_space<vmem>>, %arg9: memref<1x32xf32, #tpu.memory_space<vmem>>, %arg10: memref<1x32xf32, #tpu.memory_space<vmem>>) attributes {dimension_semantics = [#tpu.dimension_semantics<parallel>, #tpu.dimension_semantics<arbitrary>], iteration_bounds = array<i64: 2, 1>, scalar_prefetch = 0 : i64, scratch_operands = 2 : i64, tpu.core_type = #tpu.core_type<tc>, window_params = [{pipeline_mode = #tpu.pipeline_mode<synchronous>, transform_indices = @transform_0, window_bounds = array<i64: 32, 32>}, {pipeline_mode = #tpu.pipeline_mode<synchronous>, transform_indices = @transform_1, window_bounds = array<i64: 32, 32>}, {pipeline_mode = #tpu.pipeline_mode<synchronous>, transform_indices = @transform_2, window_bounds = array<i64: 1, 32>}, {pipeline_mode = #tpu.pipeline_mode<synchronous>, transform_indices = @transform_3, window_bounds = array<i64: 1, 32>}, {transform_indices = @transform_4, window_bounds = array<i64: 1, 64, 32>}, {transform_indices = @transform_5, window_bounds = array<i64: 1, 1, 32>}, {transform_indices = @transform_6, window_bounds = array<i64: 1, 1, 32>}]} {
    %c0_i32 = arith.constant 0 : i32
    %0 = arith.cmpi eq, %arg1, %c0_i32 : i32
    %1 = arith.extui %0 : i1 to i32
    %c0_i32_0 = arith.constant 0 : i32
    %2 = arith.cmpi ne, %1, %c0_i32_0 : i32
    scf.if %2 {
      %cst_14 = arith.constant 0.000000e+00 : f32
      %19 = vector.broadcast %cst_14 : f32 to vector<1x32xf32>
      %c0_15 = arith.constant 0 : index
      %c0_16 = arith.constant 0 : index
      %20 = vector.load %arg9[%c0_15, %c0_16] : memref<1x32xf32, #tpu.memory_space<vmem>>, vector<1x32xf32>
      tpu.vector_store %arg9[%c0_15, %c0_16], %19 {strides = array<i32>} : memref<1x32xf32, #tpu.memory_space<vmem>>, vector<1x32xf32>,
      %cst_17 = arith.constant 0.000000e+00 : f32
      %21 = vector.broadcast %cst_17 : f32 to vector<1x32xf32>
      %c0_18 = arith.constant 0 : index
      %c0_19 = arith.constant 0 : index
      %22 = vector.load %arg10[%c0_18, %c0_19] : memref<1x32xf32, #tpu.memory_space<vmem>>, vector<1x32xf32>
      tpu.vector_store %arg10[%c0_18, %c0_19], %21 {strides = array<i32>} : memref<1x32xf32, #tpu.memory_space<vmem>>, vector<1x32xf32>,
    } else {
    }
    %c0 = arith.constant 0 : index
    %c0_1 = arith.constant 0 : index
    %c0_2 = arith.constant 0 : index
    %3 = vector.load %arg6[%c0, %c0_1, %c0_2] : memref<1x64x32xf32, #tpu.memory_space<vmem>>, vector<1x64x32xf32>
    %4 = vector.shape_cast %3 : vector<1x64x32xf32> to vector<64x32xf32>
    %c0_3 = arith.constant 0 : index
    %c0_4 = arith.constant 0 : index
    %5 = vector.load %arg9[%c0_3, %c0_4] : memref<1x32xf32, #tpu.memory_space<vmem>>, vector<1x32xf32>
    %cst = arith.constant dense<0.000000e+00> : vector<32xf32>
    %6 = vector.multi_reduction <add>, %4, %cst [0] : vector<64x32xf32> to vector<32xf32>
    %7 = vector.shape_cast %6 : vector<32xf32> to vector<1x32xf32>
    %8 = arith.addf %5, %7 : vector<1x32xf32>
    %c0_5 = arith.constant 0 : index
    %c0_6 = arith.constant 0 : index
    %9 = vector.load %arg9[%c0_5, %c0_6] : memref<1x32xf32, #tpu.memory_space<vmem>>, vector<1x32xf32>
    tpu.vector_store %arg9[%c0_5, %c0_6], %8 {strides = array<i32>} : memref<1x32xf32, #tpu.memory_space<vmem>>, vector<1x32xf32>,
    %c0_7 = arith.constant 0 : index
    %c0_8 = arith.constant 0 : index
    %10 = vector.load %arg10[%c0_7, %c0_8] : memref<1x32xf32, #tpu.memory_space<vmem>>, vector<1x32xf32>
    %11 = arith.mulf %4, %4 : vector<64x32xf32>
    %cst_9 = arith.constant dense<0.000000e+00> : vector<32xf32>
    %12 = vector.multi_reduction <add>, %11, %cst_9 [0] : vector<64x32xf32> to vector<32xf32>
    %13 = vector.shape_cast %12 : vector<32xf32> to vector<1x32xf32>
    %14 = arith.addf %10, %13 : vector<1x32xf32>
    %c0_10 = arith.constant 0 : index
    %c0_11 = arith.constant 0 : index
    %15 = vector.load %arg10[%c0_10, %c0_11] : memref<1x32xf32, #tpu.memory_space<vmem>>, vector<1x32xf32>
    tpu.vector_store %arg10[%c0_10, %c0_11], %14 {strides = array<i32>} : memref<1x32xf32, #tpu.memory_space<vmem>>, vector<1x32xf32>,
    %c0_i32_12 = arith.constant 0 : i32
    %16 = arith.cmpi eq, %arg1, %c0_i32_12 : i32
    %17 = arith.extui %16 : i1 to i32
    %c0_i32_13 = arith.constant 0 : i32
    %18 = arith.cmpi ne, %17, %c0_i32_13 : i32
    scf.if %18 {
      %c0_14 = arith.constant 0 : index
      %c0_15 = arith.constant 0 : index
      %19 = vector.load %arg9[%c0_14, %c0_15] : memref<1x32xf32, #tpu.memory_space<vmem>>, vector<1x32xf32>
      %c0_16 = arith.constant 0 : index
      %c0_17 = arith.constant 0 : index
      %20 = vector.load %arg2[%c0_16, %c0_17] : memref<32x32xf32, #tpu.memory_space<vmem>>, vector<32x32xf32>
      %cst_18 = arith.constant dense<0.000000e+00> : vector<1x32xf32>
      %21 = tpu.matmul %19, %20, %cst_18 {dimension_numbers = #tpu.dot_dimension_numbers<[1], [0], [0], [1], [0, 0, 1, 1], [], []>} : vector<1x32xf32>, vector<32x32xf32>, vector<1x32xf32> -> vector<1x32xf32>
      %cst_19 = arith.constant 1.562500e-02 : f32
      %22 = vector.broadcast %cst_19 : f32 to vector<1x32xf32>
      %23 = arith.mulf %21, %22 : vector<1x32xf32>
      %c0_20 = arith.constant 0 : index
      %c0_21 = arith.constant 0 : index
      %24 = vector.load %arg10[%c0_20, %c0_21] : memref<1x32xf32, #tpu.memory_space<vmem>>, vector<1x32xf32>
      %c0_22 = arith.constant 0 : index
      %c0_23 = arith.constant 0 : index
      %25 = vector.load %arg2[%c0_22, %c0_23] : memref<32x32xf32, #tpu.memory_space<vmem>>, vector<32x32xf32>
      %cst_24 = arith.constant dense<0.000000e+00> : vector<1x32xf32>
      %26 = tpu.matmul %24, %25, %cst_24 {dimension_numbers = #tpu.dot_dimension_numbers<[1], [0], [0], [1], [0, 0, 1, 1], [], []>} : vector<1x32xf32>, vector<32x32xf32>, vector<1x32xf32> -> vector<1x32xf32>
      %cst_25 = arith.constant 1.562500e-02 : f32
      %27 = vector.broadcast %cst_25 : f32 to vector<1x32xf32>
      %28 = arith.mulf %26, %27 : vector<1x32xf32>
      %29 = arith.mulf %23, %23 : vector<1x32xf32>
      %30 = arith.subf %28, %29 : vector<1x32xf32>
      %cst_26 = arith.constant 0.000000e+00 : f32
      %31 = vector.broadcast %cst_26 : f32 to vector<1x32xf32>
      %32 = arith.maximumf %30, %31 : vector<1x32xf32>
      %cst_27 = arith.constant 9.99999974E-6 : f32
      %33 = vector.broadcast %cst_27 : f32 to vector<1x32xf32>
      %34 = arith.addf %32, %33 : vector<1x32xf32>
      %35 = math.rsqrt %34 : vector<1x32xf32>
      %c0_28 = arith.constant 0 : index
      %c0_29 = arith.constant 0 : index
      %36 = vector.load %arg3[%c0_28, %c0_29] : memref<32x32xf32, #tpu.memory_space<vmem>>, vector<32x32xf32>
      %cst_30 = arith.constant dense<0.000000e+00> : vector<1x32xf32>
      %37 = tpu.matmul %23, %36, %cst_30 {dimension_numbers = #tpu.dot_dimension_numbers<[1], [0], [0], [1], [0, 0, 1, 1], [], []>} : vector<1x32xf32>, vector<32x32xf32>, vector<1x32xf32> -> vector<1x32xf32>
      %c0_31 = arith.constant 0 : index
      %c0_32 = arith.constant 0 : index
      %38 = vector.load %arg3[%c0_31, %c0_32] : memref<32x32xf32, #tpu.memory_space<vmem>>, vector<32x32xf32>
      %cst_33 = arith.constant dense<0.000000e+00> : vector<1x32xf32>
      %39 = tpu.matmul %35, %38, %cst_33 {dimension_numbers = #tpu.dot_dimension_numbers<[1], [0], [0], [1], [0, 0, 1, 1], [], []>} : vector<1x32xf32>, vector<32x32xf32>, vector<1x32xf32> -> vector<1x32xf32>
      %c0_34 = arith.constant 0 : index
      %c0_35 = arith.constant 0 : index
      %40 = vector.load %arg4[%c0_34, %c0_35] : memref<1x32xf32, #tpu.memory_space<vmem>>, vector<1x32xf32>
      %41 = arith.mulf %39, %40 : vector<1x32xf32>
      %c0_36 = arith.constant 0 : index
      %c0_37 = arith.constant 0 : index
      %42 = vector.load %arg5[%c0_36, %c0_37] : memref<1x32xf32, #tpu.memory_space<vmem>>, vector<1x32xf32>
      %43 = arith.mulf %37, %41 : vector<1x32xf32>
      %44 = arith.subf %42, %43 : vector<1x32xf32>
      %c0_38 = arith.constant 0 : index
      %c0_39 = arith.constant 0 : index
      %c0_40 = arith.constant 0 : index
      %45 = vector.load %arg7[%c0_38, %c0_39, %c0_40] : memref<1x1x32xf32, #tpu.memory_space<vmem>>, vector<1x1x32xf32>
      %46 = vector.shape_cast %45 : vector<1x1x32xf32> to vector<1x32xf32>
      %47 = vector.shape_cast %41 : vector<1x32xf32> to vector<1x1x32xf32>
      tpu.vector_store %arg7[%c0_38, %c0_39, %c0_40], %47 {strides = array<i32>} : memref<1x1x32xf32, #tpu.memory_space<vmem>>, vector<1x1x32xf32>,
      %c0_41 = arith.constant 0 : index
      %c0_42 = arith.constant 0 : index
      %c0_43 = arith.constant 0 : index
      %48 = vector.load %arg8[%c0_41, %c0_42, %c0_43] : memref<1x1x32xf32, #tpu.memory_space<vmem>>, vector<1x1x32xf32>
      %49 = vector.shape_cast %48 : vector<1x1x32xf32> to vector<1x32xf32>
      %50 = vector.shape_cast %44 : vector<1x32xf32> to vector<1x1x32xf32>
      tpu.vector_store %arg8[%c0_41, %c0_42, %c0_43], %50 {strides = array<i32>} : memref<1x1x32xf32, #tpu.memory_space<vmem>>, vector<1x1x32xf32>,
    } else {
    }
    return
  }
  func.func @transform_0(%arg0: i32, %arg1: i32) -> (i32, i32) {
    %c0_i32 = arith.constant 0 : i32
    %c0_i32_0 = arith.constant 0 : i32
    %c0_i32_1 = arith.constant 0 : i32
    return %c0_i32, %c0_i32_0 : i32, i32
  }
  func.func @transform_1(%arg0: i32, %arg1: i32) -> (i32, i32) {
    %c0_i32 = arith.constant 0 : i32
    %c0_i32_0 = arith.constant 0 : i32
    %c0_i32_1 = arith.constant 0 : i32
    return %c0_i32, %c0_i32_0 : i32, i32
  }
  func.func @transform_2(%arg0: i32, %arg1: i32) -> (i32, i32) {
    %c0_i32 = arith.constant 0 : i32
    %c0_i32_0 = arith.constant 0 : i32
    %c0_i32_1 = arith.constant 0 : i32
    return %c0_i32, %c0_i32_0 : i32, i32
  }
  func.func @transform_3(%arg0: i32, %arg1: i32) -> (i32, i32) {
    %c0_i32 = arith.constant 0 : i32
    %c0_i32_0 = arith.constant 0 : i32
    %c0_i32_1 = arith.constant 0 : i32
    return %c0_i32, %c0_i32_0 : i32, i32
  }
  func.func @transform_4(%arg0: i32, %arg1: i32) -> (i32, i32, i32) {
    %c0_i32 = arith.constant 0 : i32
    %c0_i32_0 = arith.constant 0 : i32
    return %arg0, %arg1, %c0_i32 : i32, i32, i32
  }
  func.func @transform_5(%arg0: i32, %arg1: i32) -> (i32, i32, i32) {
    %c0_i32 = arith.constant 0 : i32
    %c0_i32_0 = arith.constant 0 : i32
    %c0_i32_1 = arith.constant 0 : i32
    return %arg0, %c0_i32, %c0_i32_0 : i32, i32, i32
  }
  func.func @transform_6(%arg0: i32, %arg1: i32) -> (i32, i32, i32) {
    %c0_i32 = arith.constant 0 : i32
    %c0_i32_0 = arith.constant 0 : i32
    %c0_i32_1 = arith.constant 0 : i32
    return %arg0, %c0_i32, %c0_i32_0 : i32, i32, i32
  }
}

</mosaic_0001>

<llo_original>
// kernel: tpu_custom_call.1
$region0: #{tpu_custom_call.1}
  #allocation0 [shape = 'u32[]', space=smem, size = 0x4, offset = 0x4, fixed_abs, tag = 'smem constant byte address 0x4 - core index']
  #allocation1 [shape = 'u32[72,128]{1,0:T(1,128)}', space=vmem, size = 0x9000, scoped, tag = 'internal scratch']
  #allocation2 [shape = 'f32[1,32]{1,0:T(1,128)}', space=vmem, size = 0x200, scoped, tag = 'scratch operand']
  #allocation3 [shape = 'f32[1,32]{1,0:T(1,128)}', space=vmem, size = 0x200, scoped, tag = 'scratch operand']
  %s0 = inlined_call_operand.vmem [shape: f32[32,32], index: 0, kind: input, shape index: {}]
  %s1 = inlined_call_operand.vmem [shape: f32[32,32], index: 1, kind: input, shape index: {}]
  %s2 = inlined_call_operand.vmem [shape: f32[1,32], index: 2, kind: input, shape index: {}]
  %s3 = inlined_call_operand.vmem [shape: f32[1,32], index: 3, kind: input, shape index: {}]
  %s4 = inlined_call_operand.vmem [shape: f32[2,64,32], index: 4, kind: input, shape index: {}]
  %s5 = inlined_call_operand.hbm [shape: f32[2,1,32], index: 5, kind: output, shape index: {0}]
  %s6 = inlined_call_operand.hbm [shape: f32[2,1,32], index: 6, kind: output, shape index: {1}]
  %7 = xla_tuple %s5, %s6
  %s8 = sld [smem:[#allocation0]]
  $region69: #{tpu_custom_call.1} parent=0
    _
  %s10 = ssub.s32 1, %s8
  %s11 = scalar_select 0, %s10, %s8
  $region1: #{tpu_custom_call.1} parent=0
    #allocation4 [shape = 'u8[1024]{0}', space=vmem, size = 0x400, scoped, tag = 'output window, operand 0']
    #allocation5 [shape = 's32[2]{0}', space=sflag, size = 0x8, scoped, tag = 'scoped memory for tpu_custom_call.1']
    #allocation6 [shape = 'u8[1024]{0}', space=vmem, size = 0x400, scoped, tag = 'output window, operand 1']
    #allocation7 [shape = 's32[2]{0}', space=sflag, size = 0x8, scoped, tag = 'scoped memory for tpu_custom_call.1']
    %12 = vsyncpa [#allocation5], 0
    %s13 = scalar_lea.sflag [#allocation5], 1
    %14 = vsyncpa %s13, 0
    %15 = vsyncpa [#allocation7], 0
    %s16 = scalar_lea.sflag [#allocation7], 1
    %17 = vsyncpa %s16, 0
    loop: start=0, step=1, limit=4
    $region2: #{tpu_custom_call.1} parent=1 // loop_pre_header
      _
    $region3: #{tpu_custom_call.1} parent=1 // loop_header
      %s19 = sphi 0, %s23
      %p20 = scmp.ge.s32.totalorder %s19, 4
      %s26 = sphi 0, %s38
      %s27 = sphi 0, %s34
      %s28 = sphi 0, %s26
      %s29 = sphi 0, %s27
      %s30 = sphi 0, %s28
      %s31 = sphi 0, %s29
      %s39 = sphi 0, %s39
      %s41 = sphi 0, %s39
      %s42 = sphi 0, %s41
      %s56 = sphi 0, %s42
      %s60 = sphi 0, %s60
      %s62 = sphi 0, %s60
      %s63 = sphi 0, %s62
      %s77 = sphi 0, %s63
      %s81 = sphi 0, %s81
      %s83 = sphi 0, %s81
      %s84 = sphi 0, %s83
      %s98 = sphi 0, %s84
      %s102 = sphi 0, %s102
      %s104 = sphi 0, %s102
      %s105 = sphi 0, %s104
      %s119 = sphi 0, %s105
      %s127 = sphi 0, %s129
      %s130 = sphi 0, %s127
      %s131 = sphi 0, %s130
      %s147 = sphi 0, %s131
      %s153 = sphi 0, %s155
      %s156 = sphi 0, %s153
      %s157 = sphi 0, %s156
      %s173 = sphi 0, %s157
      %s179 = sphi 0, %s181
      %s182 = sphi 0, %s179
      %s183 = sphi 0, %s182
      %s199 = sphi 0, %s183
    $region4: #{tpu_custom_call.1} parent=1 // loop_header_branch
      %22 = sbr.rel (%p20) target = $region8
    $region5: #{tpu_custom_call.1} parent=1 // loop_body
      %s24 = ssub.s32 %s19, 1
      %s25 = ssub.s32 %s19, 2
      %s32 = sadd.s32 1, %s27
      %p33 = scmp.ge.s32.totalorder %s32, 1
      %s34 = scalar_select %p33, 0, %s32
      %s35 = sadd.s32 1, %s26
      %s36 = scalar_select %p33, %s35, %s26
      %p37 = scmp.ge.s32.totalorder %s36, 2
      %s38 = scalar_select %p37, 0, %s36
      %s40 = sadd.s32 %s39, 1
      %p43 = scmp.eq.s32.totalorder %s19, 1
      %p44 = scmp.ne.s32.totalorder %s39, %s41
      %p45 = scmp.eq.s32.totalorder %s19, 0
      %p46 = por %p44, %p45
      %p47 = scmp.ne.s32.totalorder %s39, %s41
      %p48 = scmp.eq.s32.totalorder %s24, 1
      %p49 = por %p47, %p48
      %p50 = scmp.ne.s32.totalorder %s41, %s42
      %p51 = scmp.eq.s32.totalorder %s24, 0
      %p52 = por %p50, %p51
      %p53 = scmp.ne.s32.totalorder %s41, %s42
      %p54 = scmp.eq.s32.totalorder %s25, 1
      %p55 = por %p53, %p54
      %p57 = scmp.ne.s32.totalorder %s42, %s56
      %p58 = scmp.eq.s32.totalorder %s25, 0
      %p59 = por %p57, %p58
      %s61 = sadd.s32 %s60, 1
      %p64 = scmp.eq.s32.totalorder %s19, 1
      %p65 = scmp.ne.s32.totalorder %s60, %s62
      %p66 = scmp.eq.s32.totalorder %s19, 0
      %p67 = por %p65, %p66
      %p68 = scmp.ne.s32.totalorder %s60, %s62
      %p69 = scmp.eq.s32.totalorder %s24, 1
      %p70 = por %p68, %p69
      %p71 = scmp.ne.s32.totalorder %s62, %s63
      %p72 = scmp.eq.s32.totalorder %s24, 0
      %p73 = por %p71, %p72
      %p74 = scmp.ne.s32.totalorder %s62, %s63
      %p75 = scmp.eq.s32.totalorder %s25, 1
      %p76 = por %p74, %p75
      %p78 = scmp.ne.s32.totalorder %s63, %s77
      %p79 = scmp.eq.s32.totalorder %s25, 0
      %p80 = por %p78, %p79
      %s82 = sadd.s32 %s81, 1
      %p85 = scmp.eq.s32.totalorder %s19, 1
      %p86 = scmp.ne.s32.totalorder %s81, %s83
      %p87 = scmp.eq.s32.totalorder %s19, 0
      %p88 = por %p86, %p87
      %p89 = scmp.ne.s32.totalorder %s81, %s83
      %p90 = scmp.eq.s32.totalorder %s24, 1
      %p91 = por %p89, %p90
      %p92 = scmp.ne.s32.totalorder %s83, %s84
      %p93 = scmp.eq.s32.totalorder %s24, 0
      %p94 = por %p92, %p93
      %p95 = scmp.ne.s32.totalorder %s83, %s84
      %p96 = scmp.eq.s32.totalorder %s25, 1
      %p97 = por %p95, %p96
      %p99 = scmp.ne.s32.totalorder %s84, %s98
      %p100 = scmp.eq.s32.totalorder %s25, 0
      %p101 = por %p99, %p100
      %s103 = sadd.s32 %s102, 1
      %p106 = scmp.eq.s32.totalorder %s19, 1
      %p107 = scmp.ne.s32.totalorder %s102, %s104
      %p108 = scmp.eq.s32.totalorder %s19, 0
      %p109 = por %p107, %p108
      %p110 = scmp.ne.s32.totalorder %s102, %s104
      %p111 = scmp.eq.s32.totalorder %s24, 1
      %p112 = por %p110, %p111
      %p113 = scmp.ne.s32.totalorder %s104, %s105
      %p114 = scmp.eq.s32.totalorder %s24, 0
      %p115 = por %p113, %p114
      %p116 = scmp.ne.s32.totalorder %s104, %s105
      %p117 = scmp.eq.s32.totalorder %s25, 1
      %p118 = por %p116, %p117
      %p120 = scmp.ne.s32.totalorder %s105, %s119
      %p121 = scmp.eq.s32.totalorder %s25, 0
      %p122 = por %p120, %p121
      %s123 = ssub.s32 %s26, %s38
      %s124 = ssub.s32 %s27, %s34
      %s125 = sor.u32 %s123, %s124
      %p126 = scmp.eq.s32.totalorder %s125, 0
      %s128 = sadd.s32 %s127, 1
      %s129 = scalar_select %p126, %s127, %s128
      %p132 = pneg %p126
      %p133 = scmp.eq.s32.totalorder %s19, 1
      %p134 = por %p132, %p133
      %p135 = scmp.ne.s32.totalorder %s127, %s130
      %p136 = scmp.eq.s32.totalorder %s19, 0
      %p137 = por %p135, %p136
      %p138 = scmp.ne.s32.totalorder %s127, %s130
      %p139 = scmp.eq.s32.totalorder %s24, 1
      %p140 = por %p138, %p139
      %p141 = scmp.ne.s32.totalorder %s130, %s131
      %p142 = scmp.eq.s32.totalorder %s24, 0
      %p143 = por %p141, %p142
      %p144 = scmp.ne.s32.totalorder %s130, %s131
      %p145 = scmp.eq.s32.totalorder %s25, 1
      %p146 = por %p144, %p145
      %p148 = scmp.ne.s32.totalorder %s131, %s147
      %p149 = scmp.eq.s32.totalorder %s25, 0
      %p150 = por %p148, %p149
      %s151 = ssub.s32 %s26, %s38
      %p152 = scmp.eq.s32.totalorder %s151, 0
      %s154 = sadd.s32 %s153, 1
      %s155 = scalar_select %p152, %s153, %s154
      %p158 = pneg %p152
      %p159 = scmp.eq.s32.totalorder %s19, 1
      %p160 = por %p158, %p159
      %p161 = scmp.ne.s32.totalorder %s153, %s156
      %p162 = scmp.eq.s32.totalorder %s19, 0
      %p163 = por %p161, %p162
      %p164 = scmp.ne.s32.totalorder %s153, %s156
      %p165 = scmp.eq.s32.totalorder %s24, 1
      %p166 = por %p164, %p165
      %p167 = scmp.ne.s32.totalorder %s156, %s157
      %p168 = scmp.eq.s32.totalorder %s24, 0
      %p169 = por %p167, %p168
      %p170 = scmp.ne.s32.totalorder %s156, %s157
      %p171 = scmp.eq.s32.totalorder %s25, 1
      %p172 = por %p170, %p171
      %p174 = scmp.ne.s32.totalorder %s157, %s173
      %p175 = scmp.eq.s32.totalorder %s25, 0
      %p176 = por %p174, %p175
      %s177 = ssub.s32 %s26, %s38
      %p178 = scmp.eq.s32.totalorder %s177, 0
      %s180 = sadd.s32 %s179, 1
      %s181 = scalar_select %p178, %s179, %s180
      %p184 = pneg %p178
      %p185 = scmp.eq.s32.totalorder %s19, 1
      %p186 = por %p184, %p185
      %p187 = scmp.ne.s32.totalorder %s179, %s182
      %p188 = scmp.eq.s32.totalorder %s19, 0
      %p189 = por %p187, %p188
      %p190 = scmp.ne.s32.totalorder %s179, %s182
      %p191 = scmp.eq.s32.totalorder %s24, 1
      %p192 = por %p190, %p191
      %p193 = scmp.ne.s32.totalorder %s182, %s183
      %p194 = scmp.eq.s32.totalorder %s24, 0
      %p195 = por %p193, %p194
      %p196 = scmp.ne.s32.totalorder %s182, %s183
      %p197 = scmp.eq.s32.totalorder %s25, 1
      %p198 = por %p196, %p197
      %p200 = scmp.ne.s32.totalorder %s183, %s199
      %p201 = scmp.eq.s32.totalorder %s25, 0
      %p202 = por %p200, %p201
      %p203 = scmp.le.s32.totalorder 1, %s19
      %p204 = scmp.lt.s32.totalorder %s19, 3
      %p205 = pnand %p203, %p204
      %p206 = pneg %p205
      // Predicated region
      $region9: #{tpu_custom_call.1} parent=5 // pred_check
        _
      $region10: #{tpu_custom_call.1} parent=5 // pred_check_branch
        %208 = sbr.rel (%p205) target = $region12
      $region11: #{tpu_custom_call.1} parent=5 // pred_region
        %s209 = ssub.s32 %s19, 1
        // Predicated region
        $region13: #{tpu_custom_call.1} parent=11 // pred_check
          %p210 = pneg %p52
        $region14: #{tpu_custom_call.1} parent=11 // pred_check_branch
          %212 = sbr.rel (%p210) target = $region16
        $region15: #{tpu_custom_call.1} parent=11 // pred_region
          _
        $region16: #{tpu_custom_call.1} parent=11 // pred_fallthru
          _
        // Predicated region
        $region17: #{tpu_custom_call.1} parent=11 // pred_check
          %p213 = pneg %p73
        $region18: #{tpu_custom_call.1} parent=11 // pred_check_branch
          %215 = sbr.rel (%p213) target = $region20
        $region19: #{tpu_custom_call.1} parent=11 // pred_region
          _
        $region20: #{tpu_custom_call.1} parent=11 // pred_fallthru
          _
        // Predicated region
        $region21: #{tpu_custom_call.1} parent=11 // pred_check
          %p216 = pneg %p94
        $region22: #{tpu_custom_call.1} parent=11 // pred_check_branch
          %218 = sbr.rel (%p216) target = $region24
        $region23: #{tpu_custom_call.1} parent=11 // pred_region
          _
        $region24: #{tpu_custom_call.1} parent=11 // pred_fallthru
          _
        // Predicated region
        $region25: #{tpu_custom_call.1} parent=11 // pred_check
          %p219 = pneg %p115
        $region26: #{tpu_custom_call.1} parent=11 // pred_check_branch
          %221 = sbr.rel (%p219) target = $region28
        $region27: #{tpu_custom_call.1} parent=11 // pred_region
          _
        $region28: #{tpu_custom_call.1} parent=11 // pred_fallthru
          _
      $region12: #{tpu_custom_call.1} parent=5 // pred_fallthru
        _
      %p222 = scmp.lt.s32.totalorder %s19, 2
      // Predicated region
      $region29: #{tpu_custom_call.1} parent=5 // pred_check
        %p223 = pneg %p222
      $region30: #{tpu_custom_call.1} parent=5 // pred_check_branch
        %225 = sbr.rel (%p223) target = $region32
      $region31: #{tpu_custom_call.1} parent=5 // pred_region
        // Predicated region
        $region33: #{tpu_custom_call.1} parent=31 // pred_check
          %p226 = pneg %p137
        $region34: #{tpu_custom_call.1} parent=31 // pred_check_branch
          %228 = sbr.rel (%p226) target = $region36
        $region35: #{tpu_custom_call.1} parent=31 // pred_region
          %s229 = smul.u32 8, %s27
          %p230 = scmp.lt.s32.totalorder %s26, 1
          %s231 = scalar_select %p230, %s26, 1
          %p232 = scmp.lt.s32.totalorder %s229, 7
          %s233 = scalar_select %p232, %s229, 7
          %s234 = smul.addr %s231, 8
          %s235 = sadd.s32 %s233, %s234
          %s236 = smul.addr %s235, 8
          %s237 = scalar_lea.vmem %s4, %s236
          %s238 = smul.u32 8, %s27
        $region36: #{tpu_custom_call.1} parent=31 // pred_fallthru
          _
      $region32: #{tpu_custom_call.1} parent=5 // pred_fallthru
        _
      %p239 = scmp.le.s32.totalorder 1, %s19
      %p240 = scmp.lt.s32.totalorder %s19, 3
      %p241 = pnand %p239, %p240
      %p242 = pneg %p241
      // Predicated region
      $region37: #{tpu_custom_call.1} parent=5 // pred_check
        _
      $region38: #{tpu_custom_call.1} parent=5 // pred_check_branch
        %244 = sbr.rel (%p241) target = $region40
      $region39: #{tpu_custom_call.1} parent=5 // pred_region
        %s245 = ssub.s32 %s19, 1
        %p246 = pneg %p52
        %p247 = pneg %p49
        %p248 = pneg %p73
        %p249 = pneg %p70
        %p250 = pneg %p94
        %p251 = pneg %p91
        %p252 = pneg %p115
        %p253 = pneg %p112
        %s254 = smul.u32 8, %s29
        %p255 = scmp.lt.s32.totalorder %s28, 1
        %s256 = scalar_select %p255, %s28, 1
        %p257 = scmp.lt.s32.totalorder %s254, 7
        %s258 = scalar_select %p257, %s254, 7
        %s259 = smul.addr %s256, 8
        %s260 = sadd.s32 %s258, %s259
        %s261 = smul.addr %s260, 8
        %s262 = scalar_lea.vmem %s4, %s261
        %p263 = pneg %p143
        %p264 = pneg %p140
        %p265 = pneg %p169
        %p266 = pneg %p166
        %s267 = sand.u32 %s156, 1
        %s268 = scalar_lea.sflag [#allocation5], %s267
        %s269 = sand.u32 %s156, 1
        %s270 = scalar_lea.vmem [#allocation4], %s269
        %p271 = pneg %p195
        %p272 = pneg %p192
        %s273 = sand.u32 %s182, 1
        %s274 = scalar_lea.sflag [#allocation7], %s273
        %s275 = sand.u32 %s182, 1
        %s276 = scalar_lea.vmem [#allocation6], %s275
        %s277 = smul.u32 8, %s29
        %p278 = scmp.lt.s32.totalorder %s28, 1
        %s279 = scalar_select %p278, %s28, 1
        %p280 = scmp.lt.s32.totalorder %s277, 7
        %s281 = scalar_select %p280, %s277, 7
        %s282 = smul.addr %s279, 8
        %s283 = sadd.s32 %s281, %s282
        %s284 = smul.addr %s283, 8
        %s285 = scalar_lea.vmem %s4, %s284
        %s286 = smul.u32 8, %s29
        %p287 = scmp.eq.s32.totalorder %s29, 0
        // Predicated region
        $region41: #{tpu_custom_call.1} parent=39 // pred_check
          %p288 = pneg %p287
        $region42: #{tpu_custom_call.1} parent=39 // pred_check_branch
          %290 = sbr.rel (%p288) target = $region44
        $region43: #{tpu_custom_call.1} parent=39 // pred_region
          %vm291 = vcmask 253952
          %292 = vst.msk [vmem:[#allocation2] sm:$0x1] %vm291, 0.0
          %293 = vst.msk [vmem:[#allocation3] sm:$0x1] %vm291, 0.0
        $region44: #{tpu_custom_call.1} parent=39 // pred_fallthru
          _
        %v294 = vld [vmem:[%s285] sm:$0xff]
        %v295 = vld [vmem:[%s285 + $0x8] sm:$0xff]
        %v296 = vld [vmem:[%s285 + $0x10] sm:$0xff]
        %v297 = vld [vmem:[%s285 + $0x18] sm:$0xff]
        %v298 = vld [vmem:[%s285 + $0x20] sm:$0xff]
        %v299 = vld [vmem:[%s285 + $0x28] sm:$0xff]
        %v300 = vld [vmem:[%s285 + $0x30] sm:$0xff]
        %v301 = vld [vmem:[%s285 + $0x38] sm:$0xff]
        %v302 = vld [vmem:[#allocation2] sm:$0x1]
        %vm303 = vcmask 261120
        %v304 = vsel %vm303, %v294, 0.0
        %v305 = vsel %vm303, %v295, 0.0
        %v306 = vadd.f32 %v304, %v305
        %v307 = vsel %vm303, %v296, 0.0
        %v308 = vadd.f32 %v306, %v307
        %v309 = vsel %vm303, %v297, 0.0
        %v310 = vadd.f32 %v308, %v309
        %v311 = vsel %vm303, %v298, 0.0
        %v312 = vadd.f32 %v310, %v311
        %v313 = vsel %vm303, %v299, 0.0
        %v314 = vadd.f32 %v312, %v313
        %v315 = vsel %vm303, %v300, 0.0
        %v316 = vadd.f32 %v314, %v315
        %v317 = vsel %vm303, %v301, 0.0
        %v318 = vadd.f32 %v316, %v317
        %v319 = vrot.slane %v318, 4
        %v320 = vadd.f32 %v318, %v319
        %v321 = vrot.slane %v320, 2
        %v322 = vadd.f32 %v320, %v321
        %v323 = vrot.slane %v322, 1
        %v324 = vadd.f32 %v322, %v323
        %v325 = vadd.f32 %v302, %v324
        %vm326 = vcmask 253952
        %327 = vst.msk [vmem:[#allocation2] sm:$0x1] %vm326, %v325
        %v328 = vld [vmem:[#allocation3] sm:$0x1]
        %v329 = vmul.f32 %v294, %v294
        %v330 = vmul.f32 %v295, %v295
        %v331 = vmul.f32 %v296, %v296
        %v332 = vmul.f32 %v297, %v297
        %v333 = vmul.f32 %v298, %v298
        %v334 = vmul.f32 %v299, %v299
        %v335 = vmul.f32 %v300, %v300
        %v336 = vmul.f32 %v301, %v301
        %v337 = vsel %vm303, %v329, 0.0
        %v338 = vsel %vm303, %v330, 0.0
        %v339 = vadd.f32 %v337, %v338
        %v340 = vsel %vm303, %v331, 0.0
        %v341 = vadd.f32 %v339, %v340
        %v342 = vsel %vm303, %v332, 0.0
        %v343 = vadd.f32 %v341, %v342
        %v344 = vsel %vm303, %v333, 0.0
        %v345 = vadd.f32 %v343, %v344
        %v346 = vsel %vm303, %v334, 0.0
        %v347 = vadd.f32 %v345, %v346
        %v348 = vsel %vm303, %v335, 0.0
        %v349 = vadd.f32 %v347, %v348
        %v350 = vsel %vm303, %v336, 0.0
        %v351 = vadd.f32 %v349, %v350
        %v352 = vrot.slane %v351, 4
        %v353 = vadd.f32 %v351, %v352
        %v354 = vrot.slane %v353, 2
        %v355 = vadd.f32 %v353, %v354
        %v356 = vrot.slane %v355, 1
        %v357 = vadd.f32 %v355, %v356
        %v358 = vadd.f32 %v328, %v357
        %359 = vst.msk [vmem:[#allocation3] sm:$0x1] %vm326, %v358
        // Predicated region
        $region45: #{tpu_custom_call.1} parent=39 // pred_check
          %p360 = pneg %p287
        $region46: #{tpu_custom_call.1} parent=39 // pred_check_branch
          %362 = sbr.rel (%p360) target = $region48
        $region47: #{tpu_custom_call.1} parent=39 // pred_region
          %v363 = vld [vmem:[#allocation2] sm:$0x1]
          %v364 = vld [vmem:[%s0] sm:$0xff]
          %v365 = vld [vmem:[%s0 + $0x8] sm:$0xff]
          %v366 = vld [vmem:[%s0 + $0x10] sm:$0xff]
          %v367 = vld [vmem:[%s0 + $0x18] sm:$0xff]
          %v369 = vsel %vm303, %v363, 0
          %371 = vmatpush.msra.mxu0 0.0
          %372 = vmatpush.msra.mxu0 0.0
          %373 = vmatpush.msra.mxu0 0.0
          %374 = vmatpush.msra.mxu0 0.0
          %375 = vmatpush.msra.mxu0 0.0
          %376 = vmatpush.msra.mxu0 0.0
          %377 = vmatpush.msra.mxu0 0.0
          %378 = vmatpush.msra.mxu0 0.0
          %379 = vmatpush.msra.mxu0 0.0
          %380 = vmatpush.msra.mxu0 0.0
          %381 = vmatpush.msra.mxu0 0.0
          %382 = vmatpush.msra.mxu0 0.0
          %383 = vmatpush.msra.mxu0 %v367
          %384 = vmatpush.msra.mxu0 %v366
          %385 = vmatpush.msra.mxu0 %v365
          %386 = vmatpush.msra.mxu0 %v364
          %387 = vmatmul.f32.gmra.mxu0 %v369
          %v388 = vpop.f32.mrf.mxu0
          %v389 = vadd.f32 0.0, %v388
          %390 = vdwg.mxu0
          %v391 = vmul.f32 %v389, 0.015625
          %v392 = vld [vmem:[#allocation3] sm:$0x1]
          %v394 = vsel %vm303, %v392, 0
          %396 = vmatpush.msra.mxu0 0.0
          %397 = vmatpush.msra.mxu0 0.0
          %398 = vmatpush.msra.mxu0 0.0
          %399 = vmatpush.msra.mxu0 0.0
          %400 = vmatpush.msra.mxu0 0.0
          %401 = vmatpush.msra.mxu0 0.0
          %402 = vmatpush.msra.mxu0 0.0
          %403 = vmatpush.msra.mxu0 0.0
          %404 = vmatpush.msra.mxu0 0.0
          %405 = vmatpush.msra.mxu0 0.0
          %406 = vmatpush.msra.mxu0 0.0
          %407 = vmatpush.msra.mxu0 0.0
          %408 = vmatpush.msra.mxu0 %v367
          %409 = vmatpush.msra.mxu0 %v366
          %410 = vmatpush.msra.mxu0 %v365
          %411 = vmatpush.msra.mxu0 %v364
          %412 = vmatmul.f32.gmra.mxu0 %v394
          %v413 = vpop.f32.mrf.mxu0
          %v414 = vadd.f32 0.0, %v413
          %415 = vdwg.mxu0
          %v416 = vmul.f32 %v414, 0.015625
          %v417 = vmul.f32 %v391, %v391
          %v418 = vsub.f32 %v416, %v417
          %v419 = vmax.f32 %v418, 0.0
          %v420 = vadd.f32 %v419, 1e-05
          %v421 = vrsqrt.pop %v420
          %v422 = vmul.f32 %v421, %v420
          %v423 = vmul.f32 %v422, %v421
          %v424 = vmul.f32 0.5, %v423
          %v425 = vsub.f32 1.5, %v424
          %v426 = vmul.f32 %v421, %v425
          %vm427 = vweird.f32 %v420
          %vm428 = vweird.f32 %v421
          %vm429 = vmor %vm427, %vm428
          %v430 = vsel %vm429, %v421, %v426
          %v431 = vld [vmem:[%s1] sm:$0xff]
          %v432 = vld [vmem:[%s1 + $0x8] sm:$0xff]
          %v433 = vld [vmem:[%s1 + $0x10] sm:$0xff]
          %v434 = vld [vmem:[%s1 + $0x18] sm:$0xff]
          %v436 = vsel %vm303, %v391, 0
          %438 = vmatpush.msra.mxu0 0.0
          %439 = vmatpush.msra.mxu0 0.0
          %440 = vmatpush.msra.mxu0 0.0
          %441 = vmatpush.msra.mxu0 0.0
          %442 = vmatpush.msra.mxu0 0.0
          %443 = vmatpush.msra.mxu0 0.0
          %444 = vmatpush.msra.mxu0 0.0
          %445 = vmatpush.msra.mxu0 0.0
          %446 = vmatpush.msra.mxu0 0.0
          %447 = vmatpush.msra.mxu0 0.0
          %448 = vmatpush.msra.mxu0 0.0
          %449 = vmatpush.msra.mxu0 0.0
          %450 = vmatpush.msra.mxu0 %v434
          %451 = vmatpush.msra.mxu0 %v433
          %452 = vmatpush.msra.mxu0 %v432
          %453 = vmatpush.msra.mxu0 %v431
          %454 = vmatmul.f32.gmra.mxu0 %v436
          %v455 = vpop.f32.mrf.mxu0
          %v456 = vadd.f32 0.0, %v455
          %457 = vdwg.mxu0
          %v459 = vsel %vm303, %v430, 0
          %461 = vmatpush.msra.mxu0 0.0
          %462 = vmatpush.msra.mxu0 0.0
          %463 = vmatpush.msra.mxu0 0.0
          %464 = vmatpush.msra.mxu0 0.0
          %465 = vmatpush.msra.mxu0 0.0
          %466 = vmatpush.msra.mxu0 0.0
          %467 = vmatpush.msra.mxu0 0.0
          %468 = vmatpush.msra.mxu0 0.0
          %469 = vmatpush.msra.mxu0 0.0
          %470 = vmatpush.msra.mxu0 0.0
          %471 = vmatpush.msra.mxu0 0.0
          %472 = vmatpush.msra.mxu0 0.0
          %473 = vmatpush.msra.mxu0 %v434
          %474 = vmatpush.msra.mxu0 %v433
          %475 = vmatpush.msra.mxu0 %v432
          %476 = vmatpush.msra.mxu0 %v431
          %477 = vmatmul.f32.gmra.mxu0 %v459
          %v478 = vpop.f32.mrf.mxu0
          %v479 = vadd.f32 0.0, %v478
          %480 = vdwg.mxu0
          %v481 = vld [vmem:[%s2] sm:$0x1]
          %v482 = vmul.f32 %v479, %v481
          %v483 = vld [vmem:[%s3] sm:$0x1]
          %v484 = vmul.f32 %v456, %v482
          %v485 = vsub.f32 %v483, %v484
          %486 = vst.msk [vmem:[%s270] sm:$0x1] %vm326, %v482
          %487 = vst.msk [vmem:[%s276] sm:$0x1] %vm326, %v485
        $region48: #{tpu_custom_call.1} parent=39 // pred_fallthru
          _
        %s488 = sand.u32 %s156, 1
        %s489 = scalar_lea.sflag [#allocation5], %s488
        %s490 = sand.u32 %s156, 1
        %s491 = scalar_lea.vmem [#allocation4], %s490
        %s492 = sand.u32 %s182, 1
        %s493 = scalar_lea.sflag [#allocation7], %s492
        %s494 = sand.u32 %s182, 1
        %s495 = scalar_lea.vmem [#allocation6], %s494
        // Predicated region
        $region49: #{tpu_custom_call.1} parent=39 // pred_check
          %p496 = pneg %p166
        $region50: #{tpu_custom_call.1} parent=39 // pred_check_branch
          %498 = sbr.rel (%p496) target = $region52
        $region51: #{tpu_custom_call.1} parent=39 // pred_region
          %500 = vsyncadd %s489, 0
          %s501 = scalar_lea.hbm %s5, %s28
          %s503 = sshll.u32 %s491, 4
          %s504 = int_to_ptr.vmem [resolvable:$true] %s503
          %s505 = sshll.u32 %s501, 4
          %s506 = int_to_ptr.hbm [resolvable:$true] %s505
          %508 = dma.vmem_to_hbm [thread:$0]  %s504, 16, %s506, %s489
        $region52: #{tpu_custom_call.1} parent=39 // pred_fallthru
          _
        // Predicated region
        $region53: #{tpu_custom_call.1} parent=39 // pred_check
          %p509 = pneg %p192
        $region54: #{tpu_custom_call.1} parent=39 // pred_check_branch
          %511 = sbr.rel (%p509) target = $region56
        $region55: #{tpu_custom_call.1} parent=39 // pred_region
          %513 = vsyncadd %s493, 0
          %s514 = scalar_lea.hbm %s6, %s28
          %s516 = sshll.u32 %s495, 4
          %s517 = int_to_ptr.vmem [resolvable:$true] %s516
          %s518 = sshll.u32 %s514, 4
          %s519 = int_to_ptr.hbm [resolvable:$true] %s518
          %521 = dma.vmem_to_hbm [thread:$0]  %s517, 16, %s519, %s493
        $region56: #{tpu_custom_call.1} parent=39 // pred_fallthru
          _
      $region40: #{tpu_custom_call.1} parent=5 // pred_fallthru
        _
      %p522 = scmp.le.s32.totalorder 2, %s19
      // Predicated region
      $region57: #{tpu_custom_call.1} parent=5 // pred_check
        %p523 = pneg %p522
      $region58: #{tpu_custom_call.1} parent=5 // pred_check_branch
        %525 = sbr.rel (%p523) target = $region60
      $region59: #{tpu_custom_call.1} parent=5 // pred_region
        %s526 = ssub.s32 %s19, 2
        // Predicated region
        $region61: #{tpu_custom_call.1} parent=59 // pred_check
          %p527 = pneg %p172
        $region62: #{tpu_custom_call.1} parent=59 // pred_check_branch
          %529 = sbr.rel (%p527) target = $region64
        $region63: #{tpu_custom_call.1} parent=59 // pred_region
          %s530 = sand.u32 %s157, 1
          %s531 = scalar_lea.sflag [#allocation5], %s530
          %s532 = sand.u32 %s157, 1
          %s533 = scalar_lea.vmem [#allocation4], %s532
          %535 = dma.done %s531, 16
        $region64: #{tpu_custom_call.1} parent=59 // pred_fallthru
          _
        // Predicated region
        $region65: #{tpu_custom_call.1} parent=59 // pred_check
          %p536 = pneg %p198
        $region66: #{tpu_custom_call.1} parent=59 // pred_check_branch
          %538 = sbr.rel (%p536) target = $region68
        $region67: #{tpu_custom_call.1} parent=59 // pred_region
          %s539 = sand.u32 %s183, 1
          %s540 = scalar_lea.sflag [#allocation7], %s539
          %s541 = sand.u32 %s183, 1
          %s542 = scalar_lea.vmem [#allocation6], %s541
          %544 = dma.done %s540, 16
        $region68: #{tpu_custom_call.1} parent=59 // pred_fallthru
          _
      $region60: #{tpu_custom_call.1} parent=5 // pred_fallthru
        _
    $region6: #{tpu_custom_call.1} parent=1 // loop_footer
      %s23 = sadd.s32 1, %s19
    $region7: #{tpu_custom_call.1} parent=1 // loop_footer_branch
      %18 = sbr.rel target = $region3
    $region8: #{tpu_custom_call.1} parent=1 // loop_exit
      _
    %545 = vsyncpa [#allocation5], 1
    %s546 = scalar_lea.sflag [#allocation5], 1
    %547 = vsyncpa %s546, 1
    %548 = vsyncpa [#allocation7], 1
    %s549 = scalar_lea.sflag [#allocation7], 1
    %550 = vsyncpa %s549, 1

</llo_original>
